<compile_context>
chip_gen: v5e
topology: v5e:2x2
jax: 0.10.0
libtpu: 0.0.40
codegen_flags: <defaults>
</compile_context>

<pallas_src>
import jax
import jax.numpy as jnp
from jax.experimental import pallas as pl
from jax.experimental.pallas import tpu as pltpu

IN_FEATURES = 28 * 28   # 784
OUT_FEATURES = 512
TM_MAX = 1024           # batch-tile cap (see VMEM budget note above)


def _round_up(n, m):
    return ((n + m - 1) // m) * m


def _choose_tm(m):
    # Multiple of 16 (bf16 sublane pack); aim for >= 2 grid steps (v7x 2 TCs).
    half = (m + 1) // 2
    return min(TM_MAX, _round_up(max(half, 1), 16))


def _linear_relu_kernel(x_ref, w_ref, b_ref, o_ref):
    # x_ref: (TM, 784) f32     one batch tile (cast to bf16 here, on the VPU)
    # w_ref: (784, 512) bf16   full W^T, resident across all grid steps
    # b_ref: (1, 512) f32      resident
    # o_ref: (TM, 512) bf16
    x_bf = x_ref[...].astype(jnp.bfloat16)
    acc = jnp.dot(x_bf, w_ref[...], preferred_element_type=jnp.float32)
    acc = acc + b_ref[...]                       # f32 bias add, broadcast rows
    o_ref[...] = jnp.maximum(acc, 0.0).astype(o_ref.dtype)


def mlp_extractor_forward(x, w_t, b2d):
    """x: anything that flattens to (M, 784); w_t: (784, 512) bf16; b2d: (1, 512) f32."""
    x2d = x.reshape(-1, IN_FEATURES)
    M = x2d.shape[0]
    if M == 0:  # empty-batch edge case: skip the kernel entirely
        return jnp.zeros((0, OUT_FEATURES), jnp.bfloat16)

    tm = _choose_tm(M)
    grid = (pl.cdiv(M, tm),)

    bytes_accessed = (
        x2d.size * x2d.dtype.itemsize          # streamed activations (no extra cast pass)
        + w_t.size * 2                          # bf16 weights, read once (resident)
        + b2d.size * 4
        + M * OUT_FEATURES * 2                  # bf16 output
    )

    out = pl.pallas_call(
        _linear_relu_kernel,
        out_shape=jax.ShapeDtypeStruct((M, OUT_FEATURES), jnp.bfloat16),
        grid_spec=pltpu.PrefetchScalarGridSpec(
            num_scalar_prefetch=0,
            grid=grid,
            in_specs=[
                # batch tile of activations (last tile may be ragged -> masked)
                pl.BlockSpec((tm, IN_FEATURES), lambda i: (i, 0)),
                # full weight, same block every step -> stays resident in VMEM
                pl.BlockSpec((IN_FEATURES, OUT_FEATURES), lambda i: (0, 0)),
                # full bias, resident
                pl.BlockSpec((1, OUT_FEATURES), lambda i: (0, 0)),
            ],
            out_specs=pl.BlockSpec((tm, OUT_FEATURES), lambda i: (i, 0)),
        ),
        compiler_params=pltpu.CompilerParams(
            # batch axis is independent -> megacore / 2-TC sharding on v7x
            dimension_semantics=("parallel",),
        ),
        cost_estimate=pl.CostEstimate(
            flops=2 * M * IN_FEATURES * OUT_FEATURES,
            transcendentals=0,
            bytes_accessed=bytes_accessed,
        ),
    )(x2d, w_t, b2d)

    return out


def init_params(key):
    """Deterministic init matching nn.Linear(784, 512) shapes.

    PyTorch stores weight as (out, in) = (512, 784); we keep W^T = (784, 512)
    stored directly in bf16 (kernel dtype) and bias as (1, 512) f32, so the
    forward wrapper does no per-call casts/reshapes.
    Note: inputs/weights are rounded to bf16, so results differ slightly from
    an f32 PyTorch nn.Linear (acceptable for a feature extractor).
    """
    kw, kb = jax.random.split(key)
    bound = 1.0 / jnp.sqrt(jnp.float32(IN_FEATURES))
    w = jax.random.uniform(kw, (OUT_FEATURES, IN_FEATURES),
                           minval=-bound, maxval=bound, dtype=jnp.float32)
    b = jax.random.uniform(kb, (OUT_FEATURES,),
                           minval=-bound, maxval=bound, dtype=jnp.float32)
    w_t = jnp.transpose(w).astype(jnp.bfloat16)          # (784, 512) bf16
    b2d = b.reshape(1, OUT_FEATURES)                      # (1, 512) f32
    return w_t, b2d


if __name__ == "__main__":
    key = jax.random.PRNGKey(0)
    k_x, k_p = jax.random.split(key)

    # Small MNIST-like batch: (N, C, H, W) = (2, 1, 28, 28)
    x = jax.random.normal(k_x, (2, 1, 28, 28), dtype=jnp.float32)
    w_t, b2d = init_params(k_p)

    out = mlp_extractor_forward(x, w_t, b2d)
    out = jax.block_until_ready(out)

    # Reference in plain JAX using the same bf16 rounding the kernel applies
    # (x and W in bf16, f32 accumulation, f32 bias + ReLU).
    x_ref = x.reshape(-1, IN_FEATURES).astype(jnp.bfloat16).astype(jnp.float32)
    w_ref = w_t.astype(jnp.float32)
    ref = jnp.maximum(x_ref @ w_ref + b2d, 0.0)

    assert out.shape == (2, OUT_FEATURES), out.shape
    assert out.dtype == jnp.bfloat16, out.dtype
    assert jnp.allclose(out.astype(jnp.float32), ref, atol=2e-2, rtol=2e-2), \
        "mismatch vs reference"

    print("KERNEL_OK")
</pallas_src>

<mosaic_0001>
module attributes {stable_mosaic.version = 11 : i64} {
  func.func @_linear_relu_kernel(%arg0: i32, %arg1: memref<16x784xf32, #tpu.memory_space<vmem>>, %arg2: memref<784x512xbf16, #tpu.memory_space<vmem>>, %arg3: memref<1x512xf32, #tpu.memory_space<vmem>>, %arg4: memref<16x512xbf16, #tpu.memory_space<vmem>>) attributes {dimension_semantics = [#tpu.dimension_semantics<parallel>], iteration_bounds = array<i64: 1>, scalar_prefetch = 0 : i64, scratch_operands = 0 : i64, tpu.core_type = #tpu.core_type<tc>, window_params = [{transform_indices = @transform_0, window_bounds = array<i64: 16, 784>}, {pipeline_mode = #tpu.pipeline_mode<synchronous>, transform_indices = @transform_1, window_bounds = array<i64: 784, 512>}, {pipeline_mode = #tpu.pipeline_mode<synchronous>, transform_indices = @transform_2, window_bounds = array<i64: 1, 512>}, {transform_indices = @transform_3, window_bounds = array<i64: 16, 512>}]} {
    %c0 = arith.constant 0 : index
    %c0_0 = arith.constant 0 : index
    %0 = vector.load %arg1[%c0, %c0_0] : memref<16x784xf32, #tpu.memory_space<vmem>>, vector<16x784xf32>
    %1 = arith.truncf %0 : vector<16x784xf32> to vector<16x784xbf16>
    %c0_1 = arith.constant 0 : index
    %c0_2 = arith.constant 0 : index
    %2 = vector.load %arg2[%c0_1, %c0_2] : memref<784x512xbf16, #tpu.memory_space<vmem>>, vector<784x512xbf16>
    %cst = arith.constant dense<0.000000e+00> : vector<16x512xf32>
    %3 = tpu.matmul %1, %2, %cst {dimension_numbers = #tpu.dot_dimension_numbers<[1], [0], [0], [1], [0, 0, 1, 1], [], []>} : vector<16x784xbf16>, vector<784x512xbf16>, vector<16x512xf32> -> vector<16x512xf32>
    %c0_3 = arith.constant 0 : index
    %c0_4 = arith.constant 0 : index
    %4 = vector.load %arg3[%c0_3, %c0_4] : memref<1x512xf32, #tpu.memory_space<vmem>>, vector<1x512xf32>
    %5 = vector.broadcast %4 : vector<1x512xf32> to vector<16x512xf32>
    %6 = arith.addf %3, %5 : vector<16x512xf32>
    %cst_5 = arith.constant 0.000000e+00 : f32
    %7 = vector.broadcast %cst_5 : f32 to vector<16x512xf32>
    %8 = arith.maximumf %6, %7 : vector<16x512xf32>
    %9 = arith.truncf %8 : vector<16x512xf32> to vector<16x512xbf16>
    %c0_6 = arith.constant 0 : index
    %c0_7 = arith.constant 0 : index
    %10 = vector.load %arg4[%c0_6, %c0_7] : memref<16x512xbf16, #tpu.memory_space<vmem>>, vector<16x512xbf16>
    tpu.vector_store %arg4[%c0_6, %c0_7], %9 {strides = array<i32>} : memref<16x512xbf16, #tpu.memory_space<vmem>>, vector<16x512xbf16>,
    return
  }
  func.func @transform_0(%arg0: i32) -> (i32, i32) {
    %c0_i32 = arith.constant 0 : i32
    %c0_i32_0 = arith.constant 0 : i32
    return %arg0, %c0_i32 : i32, i32
  }
  func.func @transform_1(%arg0: i32) -> (i32, i32) {
    %c0_i32 = arith.constant 0 : i32
    %c0_i32_0 = arith.constant 0 : i32
    %c0_i32_1 = arith.constant 0 : i32
    return %c0_i32, %c0_i32_0 : i32, i32
  }
  func.func @transform_2(%arg0: i32) -> (i32, i32) {
    %c0_i32 = arith.constant 0 : i32
    %c0_i32_0 = arith.constant 0 : i32
    %c0_i32_1 = arith.constant 0 : i32
    return %c0_i32, %c0_i32_0 : i32, i32
  }
  func.func @transform_3(%arg0: i32) -> (i32, i32) {
    %c0_i32 = arith.constant 0 : i32
    %c0_i32_0 = arith.constant 0 : i32
    return %arg0, %c0_i32 : i32, i32
  }
}

</mosaic_0001>

<llo_original>
// kernel: tpu_custom_call.1
$region0: #{tpu_custom_call.1}
  #allocation0 [shape = 'u32[]', space=smem, size = 0x4, offset = 0x4, fixed_abs, tag = 'smem constant byte address 0x4 - core index']
  #allocation1 [shape = 'u32[72,128]{1,0:T(1,128)}', space=vmem, size = 0x9000, scoped, tag = 'internal scratch']
  %s0 = inlined_call_operand.hbm [shape: f32[2,784], index: 0, kind: input, shape index: {}]
  %s1 = inlined_call_operand.hbm [shape: bf16[784,512], index: 1, kind: input, shape index: {}]
  %s2 = inlined_call_operand.hbm [shape: f32[1,512], index: 2, kind: input, shape index: {}]
  %s3 = inlined_call_operand.hbm [shape: bf16[2,512], index: 3, kind: output, shape index: {}]
  %s4 = sld [smem:[#allocation0]]
  $region34: #{tpu_custom_call.1} parent=0
    _
  %s6 = ssub.s32 1, %s4
  %s7 = scalar_select 0, %s6, %s4
  $region1: #{tpu_custom_call.1} parent=0
    #allocation2 [shape = 'u8[57344]{0}', space=vmem, size = 0xe000, scoped, tag = 'input window, operand 0, single buffered']
    #allocation3 [shape = 's32[1]{0}', space=sflag, size = 0x4, scoped, tag = 'scoped memory for tpu_custom_call.1']
    #allocation4 [shape = 's32[1]{0}', space=sflag, size = 0x4, scoped, tag = 'scoped memory for tpu_custom_call.1']
    #allocation5 [shape = 'u8[802816]{0}', space=vmem, size = 0xc4000, scoped, tag = 'input window, operand 1, single buffered']
    #allocation6 [shape = 's32[1]{0}', space=sflag, size = 0x4, scoped, tag = 'scoped memory for tpu_custom_call.1']
    #allocation7 [shape = 'u8[2048]{0}', space=vmem, size = 0x800, scoped, tag = 'input window, operand 2, single buffered']
    #allocation8 [shape = 'u8[16384]{0}', space=vmem, size = 0x4000, scoped, tag = 'output window, operand 0, single buffered']
    %8 = vsyncpa [#allocation3], 0
    %9 = vsyncpa [#allocation6], 0
    %10 = vsyncpa [#allocation4], 0
    // Predicated region
    $region2: #{tpu_custom_call.1} parent=1 // pred_check
      _
    $region3: #{tpu_custom_call.1} parent=1 // pred_check_branch
      %12 = sbr.rel (0) target = $region5
    $region4: #{tpu_custom_call.1} parent=1 // pred_region
      %14 = vsyncadd [#allocation3], 1568
      %s15 = sshll.u32 %s0, 4
      %s16 = int_to_ptr.hbm [resolvable:$true] %s15
      %s17 = sshll.u32 [#allocation2], 4
      %s18 = int_to_ptr.vmem [resolvable:$true] %s17
      %23 = dma.hbm_to_vmem [thread:$0]  %s16, 224, %s18, [#allocation3], 224, 224, 14
    $region5: #{tpu_custom_call.1} parent=1 // pred_fallthru
      _
    // Predicated region
    $region6: #{tpu_custom_call.1} parent=1 // pred_check
      _
    $region7: #{tpu_custom_call.1} parent=1 // pred_check_branch
      %25 = sbr.rel (0) target = $region9
    $region8: #{tpu_custom_call.1} parent=1 // pred_region
      %27 = vsyncadd [#allocation6], 0
      %s28 = sshll.u32 %s1, 4
      %s29 = int_to_ptr.hbm [resolvable:$true] %s28
      %s30 = sshll.u32 [#allocation5], 4
      %s31 = int_to_ptr.vmem [resolvable:$true] %s30
      %36 = dma.hbm_to_vmem [thread:$0]  %s29, 25088, %s31, [#allocation6], 256, 256, 16
    $region9: #{tpu_custom_call.1} parent=1 // pred_fallthru
      _
    // Predicated region
    $region10: #{tpu_custom_call.1} parent=1 // pred_check
      _
    $region11: #{tpu_custom_call.1} parent=1 // pred_check_branch
      %38 = sbr.rel (0) target = $region13
    $region12: #{tpu_custom_call.1} parent=1 // pred_region
      %40 = vsyncadd [#allocation6], 0
      %s42 = sshll.u32 %s2, 4
      %s43 = int_to_ptr.hbm [resolvable:$true] %s42
      %s44 = sshll.u32 [#allocation7], 4
      %s45 = int_to_ptr.vmem [resolvable:$true] %s44
      %47 = dma.hbm_to_vmem [thread:$0]  %s43, 64, %s45, [#allocation6]
    $region13: #{tpu_custom_call.1} parent=1 // pred_fallthru
      _
    // Predicated region
    $region14: #{tpu_custom_call.1} parent=1 // pred_check
      _
    $region15: #{tpu_custom_call.1} parent=1 // pred_check_branch
      %49 = sbr.rel (0) target = $region17
    $region16: #{tpu_custom_call.1} parent=1 // pred_region
      %51 = dma.done [#allocation3], 1792
    $region17: #{tpu_custom_call.1} parent=1 // pred_fallthru
      _
    // Predicated region
    $region18: #{tpu_custom_call.1} parent=1 // pred_check
      _
    $region19: #{tpu_custom_call.1} parent=1 // pred_check_branch
      %53 = sbr.rel (0) target = $region21
    $region20: #{tpu_custom_call.1} parent=1 // pred_region
      %55 = dma.done [#allocation6], 25088
    $region21: #{tpu_custom_call.1} parent=1 // pred_fallthru
      _
    // Predicated region
    $region22: #{tpu_custom_call.1} parent=1 // pred_check
      _
    $region23: #{tpu_custom_call.1} parent=1 // pred_check_branch
      %57 = sbr.rel (0) target = $region25
    $region24: #{tpu_custom_call.1} parent=1 // pred_region
      %59 = dma.done [#allocation6], 64
    $region25: #{tpu_custom_call.1} parent=1 // pred_fallthru
      _
    %v61 = vld [vmem:[#allocation2] sm:$0xff]
    %v62 = vld [vmem:[#allocation2 + $0x8] sm:$0x3f]
    %v63 = vld [vmem:[#allocation2 + $0xe] sm:$0xff]
    %v64 = vld [vmem:[#allocation2 + $0x16] sm:$0x3f]
    %v65 = vld [vmem:[#allocation2 + $0x1c] sm:$0xff]
    %v66 = vld [vmem:[#allocation2 + $0x24] sm:$0x3f]
    %v67 = vld [vmem:[#allocation2 + $0x2a] sm:$0xff]
    %v68 = vld [vmem:[#allocation2 + $0x32] sm:$0x3f]
    %v69 = vld [vmem:[#allocation2 + $0x38] sm:$0xff]
    %v70 = vld [vmem:[#allocation2 + $0x40] sm:$0x3f]
    %v71 = vld [vmem:[#allocation2 + $0x46] sm:$0xff]
    %v72 = vld [vmem:[#allocation2 + $0x4e] sm:$0x3f]
    %v73 = vld [vmem:[#allocation2 + $0x54] sm:$0xff]
    %v74 = vld [vmem:[#allocation2 + $0x5c] sm:$0x3f]
    %v75 = vld [vmem:[#allocation2 + $0x62] sm:$0xff]
    %v76 = vld [vmem:[#allocation2 + $0x6a] sm:$0x3f]
    %93 = vst [vmem:[#allocation1] ss:$4 sm:$0xff] %v61
    %s94 = scalar_lea.vmem [#allocation1], 1
    %95 = vst [vmem:[%s94] ss:$4 sm:$0xff] %v63
    %s96 = scalar_lea.vmem [#allocation1], 2
    %97 = vst [vmem:[%s96] ss:$4 sm:$0xff] %v65
    %s98 = scalar_lea.vmem [#allocation1], 3
    %99 = vst [vmem:[%s98] ss:$4 sm:$0xff] %v67
    %s100 = scalar_lea.vmem [#allocation1], 32
    %101 = vst [vmem:[%s100] ss:$4 sm:$0xff] %v62
    %s102 = scalar_lea.vmem [#allocation1], 33
    %103 = vst [vmem:[%s102] ss:$4 sm:$0xff] %v64
    %s104 = scalar_lea.vmem [#allocation1], 34
    %105 = vst [vmem:[%s104] ss:$4 sm:$0xff] %v66
    %s106 = scalar_lea.vmem [#allocation1], 35
    %107 = vst [vmem:[%s106] ss:$4 sm:$0xff] %v68
    %v108 = vld.sshfl [vmem:[#allocation1] sm:$0xff pattern:$0x73625140]
    %v109 = vld.sshfl [vmem:[#allocation1 + $0x8] sm:$0xff pattern:$0x73625140]
    %v110 = vld.sshfl [vmem:[#allocation1 + $0x10] sm:$0xff pattern:$0x73625140]
    %v111 = vld.sshfl [vmem:[#allocation1 + $0x18] sm:$0xff pattern:$0x73625140]
    %v112 = vld.sshfl [vmem:[#allocation1 + $0x20] sm:$0xff pattern:$0x73625140]
    %v113 = vld.sshfl [vmem:[#allocation1 + $0x28] sm:$0xff pattern:$0x73625140]
    %v114 = vld.sshfl [vmem:[#allocation1 + $0x30] sm:$0xff pattern:$0x73625140]
    %115 = vst [vmem:[#allocation1] ss:$4 sm:$0xff] %v69
    %116 = vst [vmem:[%s94] ss:$4 sm:$0xff] %v71
    %117 = vst [vmem:[%s96] ss:$4 sm:$0xff] %v73
    %118 = vst [vmem:[%s98] ss:$4 sm:$0xff] %v75
    %119 = vst [vmem:[%s100] ss:$4 sm:$0xff] %v70
    %120 = vst [vmem:[%s102] ss:$4 sm:$0xff] %v72
    %121 = vst [vmem:[%s104] ss:$4 sm:$0xff] %v74
    %122 = vst [vmem:[%s106] ss:$4 sm:$0xff] %v76
    %v123 = vld.sshfl [vmem:[#allocation1] sm:$0xff pattern:$0x73625140]
    %v124 = vld.sshfl [vmem:[#allocation1 + $0x8] sm:$0xff pattern:$0x73625140]
    %v125 = vld.sshfl [vmem:[#allocation1 + $0x10] sm:$0xff pattern:$0x73625140]
    %v126 = vld.sshfl [vmem:[#allocation1 + $0x18] sm:$0xff pattern:$0x73625140]
    %v127 = vld.sshfl [vmem:[#allocation1 + $0x20] sm:$0xff pattern:$0x73625140]
    %v128 = vld.sshfl [vmem:[#allocation1 + $0x28] sm:$0xff pattern:$0x73625140]
    %v129 = vld.sshfl [vmem:[#allocation1 + $0x30] sm:$0xff pattern:$0x73625140]
    %v144 = vpack.c.bf16 %v123, %v108
    %v145 = vpack.c.bf16 %v124, %v109
    %v146 = vpack.c.bf16 %v125, %v110
    %v147 = vpack.c.bf16 %v126, %v111
    %v148 = vpack.c.bf16 %v127, %v112
    %v149 = vpack.c.bf16 %v128, %v113
    %v150 = vpack.c.bf16 %v129, %v114
    %v151 = vld [vmem:[#allocation5] sm:$0xff]
    %v152 = vld [vmem:[#allocation5 + $0x8] sm:$0xff]
    %v153 = vld [vmem:[#allocation5 + $0x10] sm:$0xff]
    %v154 = vld [vmem:[#allocation5 + $0x18] sm:$0xff]
    %v155 = vld [vmem:[#allocation5 + $0x20] sm:$0xff]
    %v156 = vld [vmem:[#allocation5 + $0x28] sm:$0xff]
    %v157 = vld [vmem:[#allocation5 + $0x30] sm:$0xff]
    %v158 = vld [vmem:[#allocation5 + $0x38] sm:$0xff]
    %v159 = vld [vmem:[#allocation5 + $0x40] sm:$0xff]
    %v160 = vld [vmem:[#allocation5 + $0x48] sm:$0xff]
    %v161 = vld [vmem:[#allocation5 + $0x50] sm:$0xff]
    %v162 = vld [vmem:[#allocation5 + $0x58] sm:$0xff]
    %v163 = vld [vmem:[#allocation5 + $0x60] sm:$0xff]
    %v164 = vld [vmem:[#allocation5 + $0x68] sm:$0xff]
    %v165 = vld [vmem:[#allocation5 + $0x70] sm:$0xff]
    %v166 = vld [vmem:[#allocation5 + $0x78] sm:$0xff]
    %v167 = vld [vmem:[#allocation5 + $0x80] sm:$0xff]
    %v168 = vld [vmem:[#allocation5 + $0x88] sm:$0xff]
    %v169 = vld [vmem:[#allocation5 + $0x90] sm:$0xff]
    %v170 = vld [vmem:[#allocation5 + $0x98] sm:$0xff]
    %v171 = vld [vmem:[#allocation5 + $0xa0] sm:$0xff]
    %v172 = vld [vmem:[#allocation5 + $0xa8] sm:$0xff]
    %v173 = vld [vmem:[#allocation5 + $0xb0] sm:$0xff]
    %v174 = vld [vmem:[#allocation5 + $0xb8] sm:$0xff]
    %v175 = vld [vmem:[#allocation5 + $0xc0] sm:$0xff]
    %v176 = vld [vmem:[#allocation5 + $0xc8] sm:$0xff]
    %v177 = vld [vmem:[#allocation5 + $0xd0] sm:$0xff]
    %v178 = vld [vmem:[#allocation5 + $0xd8] sm:$0xff]
    %v179 = vld [vmem:[#allocation5 + $0xe0] sm:$0xff]
    %v180 = vld [vmem:[#allocation5 + $0xe8] sm:$0xff]
    %v181 = vld [vmem:[#allocation5 + $0xf0] sm:$0xff]
    %v182 = vld [vmem:[#allocation5 + $0xf8] sm:$0xff]
    %v183 = vld [vmem:[#allocation5 + $0x100] sm:$0xff]
    %v184 = vld [vmem:[#allocation5 + $0x108] sm:$0xff]
    %v185 = vld [vmem:[#allocation5 + $0x110] sm:$0xff]
    %v186 = vld [vmem:[#allocation5 + $0x118] sm:$0xff]
    %v187 = vld [vmem:[#allocation5 + $0x120] sm:$0xff]
    %v188 = vld [vmem:[#allocation5 + $0x128] sm:$0xff]
    %v189 = vld [vmem:[#allocation5 + $0x130] sm:$0xff]
    %v190 = vld [vmem:[#allocation5 + $0x138] sm:$0xff]
    %v191 = vld [vmem:[#allocation5 + $0x140] sm:$0xff]
    %v192 = vld [vmem:[#allocation5 + $0x148] sm:$0xff]
    %v193 = vld [vmem:[#allocation5 + $0x150] sm:$0xff]
    %v194 = vld [vmem:[#allocation5 + $0x158] sm:$0xff]
    %v195 = vld [vmem:[#allocation5 + $0x160] sm:$0xff]
    %v196 = vld [vmem:[#allocation5 + $0x168] sm:$0xff]
    %v197 = vld [vmem:[#allocation5 + $0x170] sm:$0xff]
    %v198 = vld [vmem:[#allocation5 + $0x178] sm:$0xff]
    %v199 = vld [vmem:[#allocation5 + $0x180] sm:$0xff]
    %v200 = vld [vmem:[#allocation5 + $0x188] sm:$0xff]
    %v201 = vld [vmem:[#allocation5 + $0x190] sm:$0xff]
    %v202 = vld [vmem:[#allocation5 + $0x198] sm:$0xff]
    %v203 = vld [vmem:[#allocation5 + $0x1a0] sm:$0xff]
    %v204 = vld [vmem:[#allocation5 + $0x1a8] sm:$0xff]
    %v205 = vld [vmem:[#allocation5 + $0x1b0] sm:$0xff]
    %v206 = vld [vmem:[#allocation5 + $0x1b8] sm:$0xff]
    %v207 = vld [vmem:[#allocation5 + $0x1c0] sm:$0xff]
    %v208 = vld [vmem:[#allocation5 + $0x1c8] sm:$0xff]
    %v209 = vld [vmem:[#allocation5 + $0x1d0] sm:$0xff]
    %v210 = vld [vmem:[#allocation5 + $0x1d8] sm:$0xff]
    %v211 = vld [vmem:[#allocation5 + $0x1e0] sm:$0xff]
    %v212 = vld [vmem:[#allocation5 + $0x1e8] sm:$0xff]
    %v213 = vld [vmem:[#allocation5 + $0x1f0] sm:$0xff]
    %v214 = vld [vmem:[#allocation5 + $0x1f8] sm:$0xff]
    %v215 = vld [vmem:[#allocation5 + $0x200] sm:$0xff]
    %v216 = vld [vmem:[#allocation5 + $0x208] sm:$0xff]
    %v217 = vld [vmem:[#allocation5 + $0x210] sm:$0xff]
    %v218 = vld [vmem:[#allocation5 + $0x218] sm:$0xff]
    %v219 = vld [vmem:[#allocation5 + $0x220] sm:$0xff]
    %v220 = vld [vmem:[#allocation5 + $0x228] sm:$0xff]
    %v221 = vld [vmem:[#allocation5 + $0x230] sm:$0xff]
    %v222 = vld [vmem:[#allocation5 + $0x238] sm:$0xff]
    %v223 = vld [vmem:[#allocation5 + $0x240] sm:$0xff]
    %v224 = vld [vmem:[#allocation5 + $0x248] sm:$0xff]
    %v225 = vld [vmem:[#allocation5 + $0x250] sm:$0xff]
    %v226 = vld [vmem:[#allocation5 + $0x258] sm:$0xff]
    %v227 = vld [vmem:[#allocation5 + $0x260] sm:$0xff]
    %v228 = vld [vmem:[#allocation5 + $0x268] sm:$0xff]
    %v229 = vld [vmem:[#allocation5 + $0x270] sm:$0xff]
    %v230 = vld [vmem:[#allocation5 + $0x278] sm:$0xff]
    %v231 = vld [vmem:[#allocation5 + $0x280] sm:$0xff]
    %v232 = vld [vmem:[#allocation5 + $0x288] sm:$0xff]
    %v233 = vld [vmem:[#allocation5 + $0x290] sm:$0xff]
    %v234 = vld [vmem:[#allocation5 + $0x298] sm:$0xff]
    %v235 = vld [vmem:[#allocation5 + $0x2a0] sm:$0xff]
    %v236 = vld [vmem:[#allocation5 + $0x2a8] sm:$0xff]
    %v237 = vld [vmem:[#allocation5 + $0x2b0] sm:$0xff]
    %v238 = vld [vmem:[#allocation5 + $0x2b8] sm:$0xff]
    %v239 = vld [vmem:[#allocation5 + $0x2c0] sm:$0xff]
    %v240 = vld [vmem:[#allocation5 + $0x2c8] sm:$0xff]
    %v241 = vld [vmem:[#allocation5 + $0x2d0] sm:$0xff]
    %v242 = vld [vmem:[#allocation5 + $0x2d8] sm:$0xff]
    %v243 = vld [vmem:[#allocation5 + $0x2e0] sm:$0xff]
    %v244 = vld [vmem:[#allocation5 + $0x2e8] sm:$0xff]
    %v245 = vld [vmem:[#allocation5 + $0x2f0] sm:$0xff]
    %v246 = vld [vmem:[#allocation5 + $0x2f8] sm:$0xff]
    %v247 = vld [vmem:[#allocation5 + $0x300] sm:$0xff]
    %v248 = vld [vmem:[#allocation5 + $0x308] sm:$0xff]
    %v249 = vld [vmem:[#allocation5 + $0x310] sm:$0xff]
    %v250 = vld [vmem:[#allocation5 + $0x318] sm:$0xff]
    %v251 = vld [vmem:[#allocation5 + $0x320] sm:$0xff]
    %v252 = vld [vmem:[#allocation5 + $0x328] sm:$0xff]
    %v253 = vld [vmem:[#allocation5 + $0x330] sm:$0xff]
    %v254 = vld [vmem:[#allocation5 + $0x338] sm:$0xff]
    %v255 = vld [vmem:[#allocation5 + $0x340] sm:$0xff]
    %v256 = vld [vmem:[#allocation5 + $0x348] sm:$0xff]
    %v257 = vld [vmem:[#allocation5 + $0x350] sm:$0xff]
    %v258 = vld [vmem:[#allocation5 + $0x358] sm:$0xff]
    %v259 = vld [vmem:[#allocation5 + $0x360] sm:$0xff]
    %v260 = vld [vmem:[#allocation5 + $0x368] sm:$0xff]
    %v261 = vld [vmem:[#allocation5 + $0x370] sm:$0xff]
    %v262 = vld [vmem:[#allocation5 + $0x378] sm:$0xff]
    %v263 = vld [vmem:[#allocation5 + $0x380] sm:$0xff]
    %v264 = vld [vmem:[#allocation5 + $0x388] sm:$0xff]
    %v265 = vld [vmem:[#allocation5 + $0x390] sm:$0xff]
    %v266 = vld [vmem:[#allocation5 + $0x398] sm:$0xff]
    %v267 = vld [vmem:[#allocation5 + $0x3a0] sm:$0xff]
    %v268 = vld [vmem:[#allocation5 + $0x3a8] sm:$0xff]
    %v269 = vld [vmem:[#allocation5 + $0x3b0] sm:$0xff]
    %v270 = vld [vmem:[#allocation5 + $0x3b8] sm:$0xff]
    %v271 = vld [vmem:[#allocation5 + $0x3c0] sm:$0xff]
    %v272 = vld [vmem:[#allocation5 + $0x3c8] sm:$0xff]
    %v273 = vld [vmem:[#allocation5 + $0x3d0] sm:$0xff]
    %v274 = vld [vmem:[#allocation5 + $0x3d8] sm:$0xff]
    %v275 = vld [vmem:[#allocation5 + $0x3e0] sm:$0xff]
    %v276 = vld [vmem:[#allocation5 + $0x3e8] sm:$0xff]
    %v277 = vld [vmem:[#allocation5 + $0x3f0] sm:$0xff]
    %v278 = vld [vmem:[#allocation5 + $0x3f8] sm:$0xff]
    %v279 = vld [vmem:[#allocation5 + $0x400] sm:$0xff]
    %v280 = vld [vmem:[#allocation5 + $0x408] sm:$0xff]
    %v281 = vld [vmem:[#allocation5 + $0x410] sm:$0xff]
    %v282 = vld [vmem:[#allocation5 + $0x418] sm:$0xff]
    %v283 = vld [vmem:[#allocation5 + $0x420] sm:$0xff]
    %v284 = vld [vmem:[#allocation5 + $0x428] sm:$0xff]
    %v285 = vld [vmem:[#allocation5 + $0x430] sm:$0xff]
    %v286 = vld [vmem:[#allocation5 + $0x438] sm:$0xff]
    %v287 = vld [vmem:[#allocation5 + $0x440] sm:$0xff]
    %v288 = vld [vmem:[#allocation5 + $0x448] sm:$0xff]
    %v289 = vld [vmem:[#allocation5 + $0x450] sm:$0xff]
    %v290 = vld [vmem:[#allocation5 + $0x458] sm:$0xff]
    %v291 = vld [vmem:[#allocation5 + $0x460] sm:$0xff]
    %v292 = vld [vmem:[#allocation5 + $0x468] sm:$0xff]
    %v293 = vld [vmem:[#allocation5 + $0x470] sm:$0xff]
    %v294 = vld [vmem:[#allocation5 + $0x478] sm:$0xff]
    %v295 = vld [vmem:[#allocation5 + $0x480] sm:$0xff]
    %v296 = vld [vmem:[#allocation5 + $0x488] sm:$0xff]
    %v297 = vld [vmem:[#allocation5 + $0x490] sm:$0xff]
    %v298 = vld [vmem:[#allocation5 + $0x498] sm:$0xff]
    %v299 = vld [vmem:[#allocation5 + $0x4a0] sm:$0xff]
    %v300 = vld [vmem:[#allocation5 + $0x4a8] sm:$0xff]
    %v301 = vld [vmem:[#allocation5 + $0x4b0] sm:$0xff]
    %v302 = vld [vmem:[#allocation5 + $0x4b8] sm:$0xff]
    %v303 = vld [vmem:[#allocation5 + $0x4c0] sm:$0xff]
    %v304 = vld [vmem:[#allocation5 + $0x4c8] sm:$0xff]
    %v305 = vld [vmem:[#allocation5 + $0x4d0] sm:$0xff]
    %v306 = vld [vmem:[#allocation5 + $0x4d8] sm:$0xff]
    %v307 = vld [vmem:[#allocation5 + $0x4e0] sm:$0xff]
    %v308 = vld [vmem:[#allocation5 + $0x4e8] sm:$0xff]
    %v309 = vld [vmem:[#allocation5 + $0x4f0] sm:$0xff]
    %v310 = vld [vmem:[#allocation5 + $0x4f8] sm:$0xff]
    %v311 = vld [vmem:[#allocation5 + $0x500] sm:$0xff]
    %v312 = vld [vmem:[#allocation5 + $0x508] sm:$0xff]
    %v313 = vld [vmem:[#allocation5 + $0x510] sm:$0xff]
    %v314 = vld [vmem:[#allocation5 + $0x518] sm:$0xff]
    %v315 = vld [vmem:[#allocation5 + $0x520] sm:$0xff]
    %v316 = vld [vmem:[#allocation5 + $0x528] sm:$0xff]
    %v317 = vld [vmem:[#allocation5 + $0x530] sm:$0xff]
    %v318 = vld [vmem:[#allocation5 + $0x538] sm:$0xff]
    %v319 = vld [vmem:[#allocation5 + $0x540] sm:$0xff]
    %v320 = vld [vmem:[#allocation5 + $0x548] sm:$0xff]
    %v321 = vld [vmem:[#allocation5 + $0x550] sm:$0xff]
    %v322 = vld [vmem:[#allocation5 + $0x558] sm:$0xff]
    %v323 = vld [vmem:[#allocation5 + $0x560] sm:$0xff]
    %v324 = vld [vmem:[#allocation5 + $0x568] sm:$0xff]
    %v325 = vld [vmem:[#allocation5 + $0x570] sm:$0xff]
    %v326 = vld [vmem:[#allocation5 + $0x578] sm:$0xff]
    %v327 = vld [vmem:[#allocation5 + $0x580] sm:$0xff]
    %v328 = vld [vmem:[#allocation5 + $0x588] sm:$0xff]
    %v329 = vld [vmem:[#allocation5 + $0x590] sm:$0xff]
    %v330 = vld [vmem:[#allocation5 + $0x598] sm:$0xff]
    %v331 = vld [vmem:[#allocation5 + $0x5a0] sm:$0xff]
    %v332 = vld [vmem:[#allocation5 + $0x5a8] sm:$0xff]
    %v333 = vld [vmem:[#allocation5 + $0x5b0] sm:$0xff]
    %v334 = vld [vmem:[#allocation5 + $0x5b8] sm:$0xff]
    %v335 = vld [vmem:[#allocation5 + $0x5c0] sm:$0xff]
    %v336 = vld [vmem:[#allocation5 + $0x5c8] sm:$0xff]
    %v337 = vld [vmem:[#allocation5 + $0x5d0] sm:$0xff]
    %v338 = vld [vmem:[#allocation5 + $0x5d8] sm:$0xff]
    %v339 = vld [vmem:[#allocation5 + $0x5e0] sm:$0xff]
    %v340 = vld [vmem:[#allocation5 + $0x5e8] sm:$0xff]
    %v341 = vld [vmem:[#allocation5 + $0x5f0] sm:$0xff]
    %v342 = vld [vmem:[#allocation5 + $0x5f8] sm:$0xff]
    %v343 = vld [vmem:[#allocation5 + $0x600] sm:$0xff]
    %v344 = vld [vmem:[#allocation5 + $0x608] sm:$0xff]
    %v345 = vld [vmem:[#allocation5 + $0x610] sm:$0xff]
    %v346 = vld [vmem:[#allocation5 + $0x618] sm:$0xff]
    %v347 = vld [vmem:[#allocation7] sm:$0xf]
    %v349 = vperm.slane %v347, 0
    %v350 = vperm.slane %v347, 1
    %v351 = vperm.slane %v347, 2
    %v352 = vperm.slane %v347, 3
    %v553 = vunpack.c.l.b16 %v151
    %v554 = vunpack.c.h.b16 %v151
    %v555 = vunpack.c.l.b16 %v152
    %v556 = vunpack.c.h.b16 %v152
    %v557 = vunpack.c.l.b16 %v153
    %v558 = vunpack.c.h.b16 %v153
    %v559 = vunpack.c.l.b16 %v154
    %v560 = vunpack.c.h.b16 %v154
    %v561 = vunpack.c.l.b16 %v155
    %v562 = vunpack.c.h.b16 %v155
    %v563 = vunpack.c.l.b16 %v156
    %v564 = vunpack.c.h.b16 %v156
    %v565 = vunpack.c.l.b16 %v157
    %v566 = vunpack.c.h.b16 %v157
    %v567 = vunpack.c.l.b16 %v158
    %v568 = vunpack.c.h.b16 %v158
    %v569 = vunpack.c.l.b16 %v159
    %v570 = vunpack.c.h.b16 %v159
    %v571 = vunpack.c.l.b16 %v160
    %v572 = vunpack.c.h.b16 %v160
    %v573 = vunpack.c.l.b16 %v161
    %v574 = vunpack.c.h.b16 %v161
    %v575 = vunpack.c.l.b16 %v162
    %v576 = vunpack.c.h.b16 %v162
    %v577 = vunpack.c.l.b16 %v163
    %v578 = vunpack.c.h.b16 %v163
    %v579 = vunpack.c.l.b16 %v164
    %v580 = vunpack.c.h.b16 %v164
    %v581 = vunpack.c.l.b16 %v165
    %v582 = vunpack.c.h.b16 %v165
    %v583 = vunpack.c.l.b16 %v166
    %v584 = vunpack.c.h.b16 %v166
    %v585 = vunpack.c.l.b16 %v167
    %v586 = vunpack.c.h.b16 %v167
    %v587 = vunpack.c.l.b16 %v168
    %v588 = vunpack.c.h.b16 %v168
    %v589 = vunpack.c.l.b16 %v169
    %v590 = vunpack.c.h.b16 %v169
    %v591 = vunpack.c.l.b16 %v170
    %v592 = vunpack.c.h.b16 %v170
    %v593 = vunpack.c.l.b16 %v171
    %v594 = vunpack.c.h.b16 %v171
    %v595 = vunpack.c.l.b16 %v172
    %v596 = vunpack.c.h.b16 %v172
    %v597 = vunpack.c.l.b16 %v173
    %v598 = vunpack.c.h.b16 %v173
    %v599 = vunpack.c.l.b16 %v174
    %v600 = vunpack.c.h.b16 %v174
    %v601 = vunpack.c.l.b16 %v175
    %v602 = vunpack.c.h.b16 %v175
    %v603 = vunpack.c.l.b16 %v176
    %v604 = vunpack.c.h.b16 %v176
    %v605 = vunpack.c.l.b16 %v177
    %v606 = vunpack.c.h.b16 %v177
    %v607 = vunpack.c.l.b16 %v178
    %v608 = vunpack.c.h.b16 %v178
    %v609 = vunpack.c.l.b16 %v179
    %v610 = vunpack.c.h.b16 %v179
    %v611 = vunpack.c.l.b16 %v180
    %v612 = vunpack.c.h.b16 %v180
    %v613 = vunpack.c.l.b16 %v181
    %v614 = vunpack.c.h.b16 %v181
    %v615 = vunpack.c.l.b16 %v182
    %v616 = vunpack.c.h.b16 %v182
    %v617 = vunpack.c.l.b16 %v183
    %v618 = vunpack.c.h.b16 %v183
    %v619 = vunpack.c.l.b16 %v184
    %v620 = vunpack.c.h.b16 %v184
    %v621 = vunpack.c.l.b16 %v185
    %v622 = vunpack.c.h.b16 %v185
    %v623 = vunpack.c.l.b16 %v186
    %v624 = vunpack.c.h.b16 %v186
    %v625 = vunpack.c.l.b16 %v187
    %v626 = vunpack.c.h.b16 %v187
    %v627 = vunpack.c.l.b16 %v188
    %v628 = vunpack.c.h.b16 %v188
    %v629 = vunpack.c.l.b16 %v189
    %v630 = vunpack.c.h.b16 %v189
    %v631 = vunpack.c.l.b16 %v190
    %v632 = vunpack.c.h.b16 %v190
    %v633 = vunpack.c.l.b16 %v191
    %v634 = vunpack.c.h.b16 %v191
    %v635 = vunpack.c.l.b16 %v192
    %v636 = vunpack.c.h.b16 %v192
    %v637 = vunpack.c.l.b16 %v193
    %v638 = vunpack.c.h.b16 %v193
    %v639 = vunpack.c.l.b16 %v194
    %v640 = vunpack.c.h.b16 %v194
    %v641 = vunpack.c.l.b16 %v195
    %v642 = vunpack.c.h.b16 %v195
    %v643 = vunpack.c.l.b16 %v196
    %v644 = vunpack.c.h.b16 %v196
    %v645 = vunpack.c.l.b16 %v197
    %v646 = vunpack.c.h.b16 %v197
    %v647 = vunpack.c.l.b16 %v198
    %v648 = vunpack.c.h.b16 %v198
    %v649 = vunpack.c.l.b16 %v199
    %v650 = vunpack.c.h.b16 %v199
    %v651 = vunpack.c.l.b16 %v200
    %v652 = vunpack.c.h.b16 %v200
    %v653 = vunpack.c.l.b16 %v201
    %v654 = vunpack.c.h.b16 %v201
    %v655 = vunpack.c.l.b16 %v202
    %v656 = vunpack.c.h.b16 %v202
    %v657 = vunpack.c.l.b16 %v203
    %v658 = vunpack.c.h.b16 %v203
    %v659 = vunpack.c.l.b16 %v204
    %v660 = vunpack.c.h.b16 %v204
    %v661 = vunpack.c.l.b16 %v205
    %v662 = vunpack.c.h.b16 %v205
    %v663 = vunpack.c.l.b16 %v206
    %v664 = vunpack.c.h.b16 %v206
    %v665 = vunpack.c.l.b16 %v207
    %v666 = vunpack.c.h.b16 %v207
    %v667 = vunpack.c.l.b16 %v208
    %v668 = vunpack.c.h.b16 %v208
    %v669 = vunpack.c.l.b16 %v209
    %v670 = vunpack.c.h.b16 %v209
    %v671 = vunpack.c.l.b16 %v210
    %v672 = vunpack.c.h.b16 %v210
    %v673 = vunpack.c.l.b16 %v211
    %v674 = vunpack.c.h.b16 %v211
    %v675 = vunpack.c.l.b16 %v212
    %v676 = vunpack.c.h.b16 %v212
    %v677 = vunpack.c.l.b16 %v213
    %v678 = vunpack.c.h.b16 %v213
    %v679 = vunpack.c.l.b16 %v214
    %v680 = vunpack.c.h.b16 %v214
    %v681 = vunpack.c.l.b16 %v215
    %v682 = vunpack.c.h.b16 %v215
    %v683 = vunpack.c.l.b16 %v216
    %v684 = vunpack.c.h.b16 %v216
    %v685 = vunpack.c.l.b16 %v217
    %v686 = vunpack.c.h.b16 %v217
    %v687 = vunpack.c.l.b16 %v218
    %v688 = vunpack.c.h.b16 %v218
    %v689 = vunpack.c.l.b16 %v219
    %v690 = vunpack.c.h.b16 %v219
    %v691 = vunpack.c.l.b16 %v220
    %v692 = vunpack.c.h.b16 %v220
    %v693 = vunpack.c.l.b16 %v221
    %v694 = vunpack.c.h.b16 %v221
    %v695 = vunpack.c.l.b16 %v222
    %v696 = vunpack.c.h.b16 %v222
    %v697 = vunpack.c.l.b16 %v223
    %v698 = vunpack.c.h.b16 %v223
    %v699 = vunpack.c.l.b16 %v224
    %v700 = vunpack.c.h.b16 %v224
    %v701 = vunpack.c.l.b16 %v225
    %v702 = vunpack.c.h.b16 %v225
    %v703 = vunpack.c.l.b16 %v226
    %v704 = vunpack.c.h.b16 %v226
    %v705 = vunpack.c.l.b16 %v227
    %v706 = vunpack.c.h.b16 %v227
    %v707 = vunpack.c.l.b16 %v228
    %v708 = vunpack.c.h.b16 %v228
    %v709 = vunpack.c.l.b16 %v229
    %v710 = vunpack.c.h.b16 %v229
    %v711 = vunpack.c.l.b16 %v230
    %v712 = vunpack.c.h.b16 %v230
    %v713 = vunpack.c.l.b16 %v231
    %v714 = vunpack.c.h.b16 %v231
    %v715 = vunpack.c.l.b16 %v232
    %v716 = vunpack.c.h.b16 %v232
    %v717 = vunpack.c.l.b16 %v233
    %v718 = vunpack.c.h.b16 %v233
    %v719 = vunpack.c.l.b16 %v234
    %v720 = vunpack.c.h.b16 %v234
    %v721 = vunpack.c.l.b16 %v235
    %v722 = vunpack.c.h.b16 %v235
    %v723 = vunpack.c.l.b16 %v236
    %v724 = vunpack.c.h.b16 %v236
    %v725 = vunpack.c.l.b16 %v237
    %v726 = vunpack.c.h.b16 %v237
    %v727 = vunpack.c.l.b16 %v238
    %v728 = vunpack.c.h.b16 %v238
    %v729 = vunpack.c.l.b16 %v239
    %v730 = vunpack.c.h.b16 %v239
    %v731 = vunpack.c.l.b16 %v240
    %v732 = vunpack.c.h.b16 %v240
    %v733 = vunpack.c.l.b16 %v241
    %v734 = vunpack.c.h.b16 %v241
    %v735 = vunpack.c.l.b16 %v242
    %v736 = vunpack.c.h.b16 %v242
    %v737 = vunpack.c.l.b16 %v243
    %v738 = vunpack.c.h.b16 %v243
    %v739 = vunpack.c.l.b16 %v244
    %v740 = vunpack.c.h.b16 %v244
    %v741 = vunpack.c.l.b16 %v245
    %v742 = vunpack.c.h.b16 %v245
    %v743 = vunpack.c.l.b16 %v246
    %v744 = vunpack.c.h.b16 %v246
    %v745 = vunpack.c.l.b16 %v247
    %v746 = vunpack.c.h.b16 %v247
    %v747 = vunpack.c.l.b16 %v248
    %v748 = vunpack.c.h.b16 %v248
    %v749 = vunpack.c.l.b16 %v249
    %v750 = vunpack.c.h.b16 %v249
    %v751 = vunpack.c.l.b16 %v250
    %v752 = vunpack.c.h.b16 %v250
    %v753 = vunpack.c.l.b16 %v251
    %v754 = vunpack.c.h.b16 %v251
    %v755 = vunpack.c.l.b16 %v252
    %v756 = vunpack.c.h.b16 %v252
    %v757 = vunpack.c.l.b16 %v253
    %v758 = vunpack.c.h.b16 %v253
    %v759 = vunpack.c.l.b16 %v254
    %v760 = vunpack.c.h.b16 %v254
    %v761 = vunpack.c.l.b16 %v255
    %v762 = vunpack.c.h.b16 %v255
    %v763 = vunpack.c.l.b16 %v256
    %v764 = vunpack.c.h.b16 %v256
    %v765 = vunpack.c.l.b16 %v257
    %v766 = vunpack.c.h.b16 %v257
    %v767 = vunpack.c.l.b16 %v258
    %v768 = vunpack.c.h.b16 %v258
    %v769 = vunpack.c.l.b16 %v259
    %v770 = vunpack.c.h.b16 %v259
    %v771 = vunpack.c.l.b16 %v260
    %v772 = vunpack.c.h.b16 %v260
    %v773 = vunpack.c.l.b16 %v261
    %v774 = vunpack.c.h.b16 %v261
    %v775 = vunpack.c.l.b16 %v262
    %v776 = vunpack.c.h.b16 %v262
    %v777 = vunpack.c.l.b16 %v263
    %v778 = vunpack.c.h.b16 %v263
    %v779 = vunpack.c.l.b16 %v264
    %v780 = vunpack.c.h.b16 %v264
    %v781 = vunpack.c.l.b16 %v265
    %v782 = vunpack.c.h.b16 %v265
    %v783 = vunpack.c.l.b16 %v266
    %v784 = vunpack.c.h.b16 %v266
    %v785 = vunpack.c.l.b16 %v267
    %v786 = vunpack.c.h.b16 %v267
    %v787 = vunpack.c.l.b16 %v268
    %v788 = vunpack.c.h.b16 %v268
    %v789 = vunpack.c.l.b16 %v269
    %v790 = vunpack.c.h.b16 %v269
    %v791 = vunpack.c.l.b16 %v270
    %v792 = vunpack.c.h.b16 %v270
    %v793 = vunpack.c.l.b16 %v271
    %v794 = vunpack.c.h.b16 %v271
    %v795 = vunpack.c.l.b16 %v272
    %v796 = vunpack.c.h.b16 %v272
    %v797 = vunpack.c.l.b16 %v273
    %v798 = vunpack.c.h.b16 %v273
    %v799 = vunpack.c.l.b16 %v274
    %v800 = vunpack.c.h.b16 %v274
    %v801 = vunpack.c.l.b16 %v275
    %v802 = vunpack.c.h.b16 %v275
    %v803 = vunpack.c.l.b16 %v276
    %v804 = vunpack.c.h.b16 %v276
    %v805 = vunpack.c.l.b16 %v277
    %v806 = vunpack.c.h.b16 %v277
    %v807 = vunpack.c.l.b16 %v278
    %v808 = vunpack.c.h.b16 %v278
    %v809 = vunpack.c.l.b16 %v279
    %v810 = vunpack.c.h.b16 %v279
    %v811 = vunpack.c.l.b16 %v280
    %v812 = vunpack.c.h.b16 %v280
    %v813 = vunpack.c.l.b16 %v281
    %v814 = vunpack.c.h.b16 %v281
    %v815 = vunpack.c.l.b16 %v282
    %v816 = vunpack.c.h.b16 %v282
    %v817 = vunpack.c.l.b16 %v283
    %v818 = vunpack.c.h.b16 %v283
    %v819 = vunpack.c.l.b16 %v284
    %v820 = vunpack.c.h.b16 %v284
    %v821 = vunpack.c.l.b16 %v285
    %v822 = vunpack.c.h.b16 %v285
    %v823 = vunpack.c.l.b16 %v286
    %v824 = vunpack.c.h.b16 %v286
    %v825 = vunpack.c.l.b16 %v287
    %v826 = vunpack.c.h.b16 %v287
    %v827 = vunpack.c.l.b16 %v288
    %v828 = vunpack.c.h.b16 %v288
    %v829 = vunpack.c.l.b16 %v289
    %v830 = vunpack.c.h.b16 %v289
    %v831 = vunpack.c.l.b16 %v290
    %v832 = vunpack.c.h.b16 %v290
    %v833 = vunpack.c.l.b16 %v291
    %v834 = vunpack.c.h.b16 %v291
    %v835 = vunpack.c.l.b16 %v292
    %v836 = vunpack.c.h.b16 %v292
    %v837 = vunpack.c.l.b16 %v293
    %v838 = vunpack.c.h.b16 %v293
    %v839 = vunpack.c.l.b16 %v294
    %v840 = vunpack.c.h.b16 %v294
    %v841 = vunpack.c.l.b16 %v295
    %v842 = vunpack.c.h.b16 %v295
    %v843 = vunpack.c.l.b16 %v296
    %v844 = vunpack.c.h.b16 %v296
    %v845 = vunpack.c.l.b16 %v297
    %v846 = vunpack.c.h.b16 %v297
    %v847 = vunpack.c.l.b16 %v298
    %v848 = vunpack.c.h.b16 %v298
    %v849 = vunpack.c.l.b16 %v299
    %v850 = vunpack.c.h.b16 %v299
    %v851 = vunpack.c.l.b16 %v300
    %v852 = vunpack.c.h.b16 %v300
    %v853 = vunpack.c.l.b16 %v301
    %v854 = vunpack.c.h.b16 %v301
    %v855 = vunpack.c.l.b16 %v302
    %v856 = vunpack.c.h.b16 %v302
    %v857 = vunpack.c.l.b16 %v303
    %v858 = vunpack.c.h.b16 %v303
    %v859 = vunpack.c.l.b16 %v304
    %v860 = vunpack.c.h.b16 %v304
    %v861 = vunpack.c.l.b16 %v305
    %v862 = vunpack.c.h.b16 %v305
    %v863 = vunpack.c.l.b16 %v306
    %v864 = vunpack.c.h.b16 %v306
    %v865 = vunpack.c.l.b16 %v307
    %v866 = vunpack.c.h.b16 %v307
    %v867 = vunpack.c.l.b16 %v308
    %v868 = vunpack.c.h.b16 %v308
    %v869 = vunpack.c.l.b16 %v309
    %v870 = vunpack.c.h.b16 %v309
    %v871 = vunpack.c.l.b16 %v310
    %v872 = vunpack.c.h.b16 %v310
    %v873 = vunpack.c.l.b16 %v311
    %v874 = vunpack.c.h.b16 %v311
    %v875 = vunpack.c.l.b16 %v312
    %v876 = vunpack.c.h.b16 %v312
    %v877 = vunpack.c.l.b16 %v313
    %v878 = vunpack.c.h.b16 %v313
    %v879 = vunpack.c.l.b16 %v314
    %v880 = vunpack.c.h.b16 %v314
    %v881 = vunpack.c.l.b16 %v315
    %v882 = vunpack.c.h.b16 %v315
    %v883 = vunpack.c.l.b16 %v316
    %v884 = vunpack.c.h.b16 %v316
    %v885 = vunpack.c.l.b16 %v317
    %v886 = vunpack.c.h.b16 %v317
    %v887 = vunpack.c.l.b16 %v318
    %v888 = vunpack.c.h.b16 %v318
    %v889 = vunpack.c.l.b16 %v319
    %v890 = vunpack.c.h.b16 %v319
    %v891 = vunpack.c.l.b16 %v320
    %v892 = vunpack.c.h.b16 %v320
    %v893 = vunpack.c.l.b16 %v321
    %v894 = vunpack.c.h.b16 %v321
    %v895 = vunpack.c.l.b16 %v322
    %v896 = vunpack.c.h.b16 %v322
    %v897 = vunpack.c.l.b16 %v323
    %v898 = vunpack.c.h.b16 %v323
    %v899 = vunpack.c.l.b16 %v324
    %v900 = vunpack.c.h.b16 %v324
    %v901 = vunpack.c.l.b16 %v325
    %v902 = vunpack.c.h.b16 %v325
    %v903 = vunpack.c.l.b16 %v326
    %v904 = vunpack.c.h.b16 %v326
    %v905 = vunpack.c.l.b16 %v327
    %v906 = vunpack.c.h.b16 %v327
    %v907 = vunpack.c.l.b16 %v328
    %v908 = vunpack.c.h.b16 %v328
    %v909 = vunpack.c.l.b16 %v329
    %v910 = vunpack.c.h.b16 %v329
    %v911 = vunpack.c.l.b16 %v330
    %v912 = vunpack.c.h.b16 %v330
    %v913 = vunpack.c.l.b16 %v331
    %v914 = vunpack.c.h.b16 %v331
    %v915 = vunpack.c.l.b16 %v332
    %v916 = vunpack.c.h.b16 %v332
    %v917 = vunpack.c.l.b16 %v333
    %v918 = vunpack.c.h.b16 %v333
    %v919 = vunpack.c.l.b16 %v334
    %v920 = vunpack.c.h.b16 %v334
    %v921 = vunpack.c.l.b16 %v335
    %v922 = vunpack.c.h.b16 %v335
    %v923 = vunpack.c.l.b16 %v336
    %v924 = vunpack.c.h.b16 %v336
    %v925 = vunpack.c.l.b16 %v337
    %v926 = vunpack.c.h.b16 %v337
    %v927 = vunpack.c.l.b16 %v338
    %v928 = vunpack.c.h.b16 %v338
    %v929 = vunpack.c.l.b16 %v339
    %v930 = vunpack.c.h.b16 %v339
    %v931 = vunpack.c.l.b16 %v340
    %v932 = vunpack.c.h.b16 %v340
    %v933 = vunpack.c.l.b16 %v341
    %v934 = vunpack.c.h.b16 %v341
    %v935 = vunpack.c.l.b16 %v342
    %v936 = vunpack.c.h.b16 %v342
    %v937 = vunpack.c.l.b16 %v343
    %v938 = vunpack.c.h.b16 %v343
    %v939 = vunpack.c.l.b16 %v344
    %v940 = vunpack.c.h.b16 %v344
    %v941 = vunpack.c.l.b16 %v345
    %v942 = vunpack.c.h.b16 %v345
    %v943 = vunpack.c.l.b16 %v346
    %v944 = vunpack.c.h.b16 %v346
    %v945 = vpack.c.b16 %v557, %v553
    %v946 = vpack.c.b16 %v558, %v554
    %v947 = vpack.c.b16 %v559, %v555
    %v948 = vpack.c.b16 %v560, %v556
    %v949 = vpack.c.b16 %v565, %v561
    %v950 = vpack.c.b16 %v566, %v562
    %v951 = vpack.c.b16 %v567, %v563
    %v952 = vpack.c.b16 %v568, %v564
    %v953 = vpack.c.b16 %v573, %v569
    %v954 = vpack.c.b16 %v574, %v570
    %v955 = vpack.c.b16 %v575, %v571
    %v956 = vpack.c.b16 %v576, %v572
    %v957 = vpack.c.b16 %v581, %v577
    %v958 = vpack.c.b16 %v582, %v578
    %v959 = vpack.c.b16 %v583, %v579
    %v960 = vpack.c.b16 %v584, %v580
    %v961 = vpack.c.b16 %v589, %v585
    %v962 = vpack.c.b16 %v590, %v586
    %v963 = vpack.c.b16 %v591, %v587
    %v964 = vpack.c.b16 %v592, %v588
    %v965 = vpack.c.b16 %v597, %v593
    %v966 = vpack.c.b16 %v598, %v594
    %v967 = vpack.c.b16 %v599, %v595
    %v968 = vpack.c.b16 %v600, %v596
    %v969 = vpack.c.b16 %v605, %v601
    %v970 = vpack.c.b16 %v606, %v602
    %v971 = vpack.c.b16 %v607, %v603
    %v972 = vpack.c.b16 %v608, %v604
    %v973 = vpack.c.b16 %v613, %v609
    %v974 = vpack.c.b16 %v614, %v610
    %v975 = vpack.c.b16 %v615, %v611
    %v976 = vpack.c.b16 %v616, %v612
    %v977 = vpack.c.b16 %v621, %v617
    %v978 = vpack.c.b16 %v622, %v618
    %v979 = vpack.c.b16 %v623, %v619
    %v980 = vpack.c.b16 %v624, %v620
    %v981 = vpack.c.b16 %v629, %v625
    %v982 = vpack.c.b16 %v630, %v626
    %v983 = vpack.c.b16 %v631, %v627
    %v984 = vpack.c.b16 %v632, %v628
    %v985 = vpack.c.b16 %v637, %v633
    %v986 = vpack.c.b16 %v638, %v634
    %v987 = vpack.c.b16 %v639, %v635
    %v988 = vpack.c.b16 %v640, %v636
    %v989 = vpack.c.b16 %v645, %v641
    %v990 = vpack.c.b16 %v646, %v642
    %v991 = vpack.c.b16 %v647, %v643
    %v992 = vpack.c.b16 %v648, %v644
    %v993 = vpack.c.b16 %v653, %v649
    %v994 = vpack.c.b16 %v654, %v650
    %v995 = vpack.c.b16 %v655, %v651
    %v996 = vpack.c.b16 %v656, %v652
    %v997 = vpack.c.b16 %v661, %v657
    %v998 = vpack.c.b16 %v662, %v658
    %v999 = vpack.c.b16 %v663, %v659
    %v1000 = vpack.c.b16 %v664, %v660
    %v1001 = vpack.c.b16 %v669, %v665
    %v1002 = vpack.c.b16 %v670, %v666
    %v1003 = vpack.c.b16 %v671, %v667
    %v1004 = vpack.c.b16 %v672, %v668
    %v1005 = vpack.c.b16 %v677, %v673
    %v1006 = vpack.c.b16 %v678, %v674
    %v1007 = vpack.c.b16 %v679, %v675
    %v1008 = vpack.c.b16 %v680, %v676
    %v1009 = vpack.c.b16 %v685, %v681
    %v1010 = vpack.c.b16 %v686, %v682
    %v1011 = vpack.c.b16 %v687, %v683
    %v1012 = vpack.c.b16 %v688, %v684
    %v1013 = vpack.c.b16 %v693, %v689
    %v1014 = vpack.c.b16 %v694, %v690
    %v1015 = vpack.c.b16 %v695, %v691
    %v1016 = vpack.c.b16 %v696, %v692
    %v1017 = vpack.c.b16 %v701, %v697
    %v1018 = vpack.c.b16 %v702, %v698
    %v1019 = vpack.c.b16 %v703, %v699
    %v1020 = vpack.c.b16 %v704, %v700
    %v1021 = vpack.c.b16 %v709, %v705
    %v1022 = vpack.c.b16 %v710, %v706
    %v1023 = vpack.c.b16 %v711, %v707
    %v1024 = vpack.c.b16 %v712, %v708
    %v1025 = vpack.c.b16 %v717, %v713
    %v1026 = vpack.c.b16 %v718, %v714
    %v1027 = vpack.c.b16 %v719, %v715
    %v1028 = vpack.c.b16 %v720, %v716
    %v1029 = vpack.c.b16 %v725, %v721
    %v1030 = vpack.c.b16 %v726, %v722
    %v1031 = vpack.c.b16 %v727, %v723
    %v1032 = vpack.c.b16 %v728, %v724
    %v1033 = vpack.c.b16 %v733, %v729
    %v1034 = vpack.c.b16 %v734, %v730
    %v1035 = vpack.c.b16 %v735, %v731
    %v1036 = vpack.c.b16 %v736, %v732
    %v1037 = vpack.c.b16 %v741, %v737
    %v1038 = vpack.c.b16 %v742, %v738
    %v1039 = vpack.c.b16 %v743, %v739
    %v1040 = vpack.c.b16 %v744, %v740
    %v1041 = vpack.c.b16 %v749, %v745
    %v1042 = vpack.c.b16 %v750, %v746
    %v1043 = vpack.c.b16 %v751, %v747
    %v1044 = vpack.c.b16 %v752, %v748
    %v1045 = vpack.c.b16 %v757, %v753
    %v1046 = vpack.c.b16 %v758, %v754
    %v1047 = vpack.c.b16 %v759, %v755
    %v1048 = vpack.c.b16 %v760, %v756
    %v1049 = vpack.c.b16 %v765, %v761
    %v1050 = vpack.c.b16 %v766, %v762
    %v1051 = vpack.c.b16 %v767, %v763
    %v1052 = vpack.c.b16 %v768, %v764
    %v1053 = vpack.c.b16 %v773, %v769
    %v1054 = vpack.c.b16 %v774, %v770
    %v1055 = vpack.c.b16 %v775, %v771
    %v1056 = vpack.c.b16 %v776, %v772
    %v1057 = vpack.c.b16 %v781, %v777
    %v1058 = vpack.c.b16 %v782, %v778
    %v1059 = vpack.c.b16 %v783, %v779
    %v1060 = vpack.c.b16 %v784, %v780
    %v1061 = vpack.c.b16 %v789, %v785
    %v1062 = vpack.c.b16 %v790, %v786
    %v1063 = vpack.c.b16 %v791, %v787
    %v1064 = vpack.c.b16 %v792, %v788
    %v1065 = vpack.c.b16 %v797, %v793
    %v1066 = vpack.c.b16 %v798, %v794
    %v1067 = vpack.c.b16 %v799, %v795
    %v1068 = vpack.c.b16 %v800, %v796
    %v1069 = vpack.c.b16 %v805, %v801
    %v1070 = vpack.c.b16 %v806, %v802
    %v1071 = vpack.c.b16 %v807, %v803
    %v1072 = vpack.c.b16 %v808, %v804
    %v1073 = vpack.c.b16 %v813, %v809
    %v1074 = vpack.c.b16 %v814, %v810
    %v1075 = vpack.c.b16 %v815, %v811
    %v1076 = vpack.c.b16 %v816, %v812
    %v1077 = vpack.c.b16 %v821, %v817
    %v1078 = vpack.c.b16 %v822, %v818
    %v1079 = vpack.c.b16 %v823, %v819
    %v1080 = vpack.c.b16 %v824, %v820
    %v1081 = vpack.c.b16 %v829, %v825
    %v1082 = vpack.c.b16 %v830, %v826
    %v1083 = vpack.c.b16 %v831, %v827
    %v1084 = vpack.c.b16 %v832, %v828
    %v1085 = vpack.c.b16 %v837, %v833
    %v1086 = vpack.c.b16 %v838, %v834
    %v1087 = vpack.c.b16 %v839, %v835
    %v1088 = vpack.c.b16 %v840, %v836
    %v1089 = vpack.c.b16 %v845, %v841
    %v1090 = vpack.c.b16 %v846, %v842
    %v1091 = vpack.c.b16 %v847, %v843
    %v1092 = vpack.c.b16 %v848, %v844
    %v1093 = vpack.c.b16 %v853, %v849
    %v1094 = vpack.c.b16 %v854, %v850
    %v1095 = vpack.c.b16 %v855, %v851
    %v1096 = vpack.c.b16 %v856, %v852
    %v1097 = vpack.c.b16 %v861, %v857
    %v1098 = vpack.c.b16 %v862, %v858
    %v1099 = vpack.c.b16 %v863, %v859
    %v1100 = vpack.c.b16 %v864, %v860
    %v1101 = vpack.c.b16 %v869, %v865
    %v1102 = vpack.c.b16 %v870, %v866
    %v1103 = vpack.c.b16 %v871, %v867
    %v1104 = vpack.c.b16 %v872, %v868
    %v1105 = vpack.c.b16 %v877, %v873
    %v1106 = vpack.c.b16 %v878, %v874
    %v1107 = vpack.c.b16 %v879, %v875
    %v1108 = vpack.c.b16 %v880, %v876
    %v1109 = vpack.c.b16 %v885, %v881
    %v1110 = vpack.c.b16 %v886, %v882
    %v1111 = vpack.c.b16 %v887, %v883
    %v1112 = vpack.c.b16 %v888, %v884
    %v1113 = vpack.c.b16 %v893, %v889
    %v1114 = vpack.c.b16 %v894, %v890
    %v1115 = vpack.c.b16 %v895, %v891
    %v1116 = vpack.c.b16 %v896, %v892
    %v1117 = vpack.c.b16 %v901, %v897
    %v1118 = vpack.c.b16 %v902, %v898
    %v1119 = vpack.c.b16 %v903, %v899
    %v1120 = vpack.c.b16 %v904, %v900
    %v1121 = vpack.c.b16 %v909, %v905
    %v1122 = vpack.c.b16 %v910, %v906
    %v1123 = vpack.c.b16 %v911, %v907
    %v1124 = vpack.c.b16 %v912, %v908
    %v1125 = vpack.c.b16 %v917, %v913
    %v1126 = vpack.c.b16 %v918, %v914
    %v1127 = vpack.c.b16 %v919, %v915
    %v1128 = vpack.c.b16 %v920, %v916
    %v1129 = vpack.c.b16 %v925, %v921
    %v1130 = vpack.c.b16 %v926, %v922
    %v1131 = vpack.c.b16 %v927, %v923
    %v1132 = vpack.c.b16 %v928, %v924
    %v1133 = vpack.c.b16 %v933, %v929
    %v1134 = vpack.c.b16 %v934, %v930
    %v1135 = vpack.c.b16 %v935, %v931
    %v1136 = vpack.c.b16 %v936, %v932
    %v1137 = vpack.c.b16 %v941, %v937
    %v1138 = vpack.c.b16 %v942, %v938
    %v1139 = vpack.c.b16 %v943, %v939
    %v1140 = vpack.c.b16 %v944, %v940
    %vm1337 = vcmask 130048
    %v1339 = vsel %vm1337, %v150, 0
    %1341 = vmatpush.bf16.msra.mxu0 %v973
    %1342 = vmatpush.bf16.msra.mxu0 %v969
    %1343 = vmatpush.bf16.msra.mxu0 %v965
    %1344 = vmatpush.bf16.msra.mxu0 %v961
    %1345 = vmatpush.bf16.msra.mxu0 %v957
    %1346 = vmatpush.bf16.msra.mxu0 %v953
    %1347 = vmatpush.bf16.msra.mxu0 %v949
    %1348 = vmatpush.bf16.msra.mxu0 %v945
    %1349 = vmatmul.bf16.gmra.mxu0 %v144
    %v1350 = vpop.f32.mrf.mxu0
    %v1351 = vadd.f32 %v349, %v1350
    %v1352 = vpop.f32.mrf.mxu0
    %v1353 = vadd.f32 %v349, %v1352
    %1354 = vdwg.mxu0
    %1355 = vmatpush.bf16.msra.mxu0 %v1005
    %1356 = vmatpush.bf16.msra.mxu0 %v1001
    %1357 = vmatpush.bf16.msra.mxu0 %v997
    %1358 = vmatpush.bf16.msra.mxu0 %v993
    %1359 = vmatpush.bf16.msra.mxu0 %v989
    %1360 = vmatpush.bf16.msra.mxu0 %v985
    %1361 = vmatpush.bf16.msra.mxu0 %v981
    %1362 = vmatpush.bf16.msra.mxu0 %v977
    %1363 = vmatmul.bf16.gmra.mxu0 %v145
    %v1364 = vpop.f32.mrf.mxu0
    %v1365 = vadd.f32 %v1351, %v1364
    %v1366 = vpop.f32.mrf.mxu0
    %v1367 = vadd.f32 %v1353, %v1366
    %1368 = vdwg.mxu0
    %1369 = vmatpush.bf16.msra.mxu0 %v1037
    %1370 = vmatpush.bf16.msra.mxu0 %v1033
    %1371 = vmatpush.bf16.msra.mxu0 %v1029
    %1372 = vmatpush.bf16.msra.mxu0 %v1025
    %1373 = vmatpush.bf16.msra.mxu0 %v1021
    %1374 = vmatpush.bf16.msra.mxu0 %v1017
    %1375 = vmatpush.bf16.msra.mxu0 %v1013
    %1376 = vmatpush.bf16.msra.mxu0 %v1009
    %1377 = vmatmul.bf16.gmra.mxu0 %v146
    %v1378 = vpop.f32.mrf.mxu0
    %v1379 = vadd.f32 %v1365, %v1378
    %v1380 = vpop.f32.mrf.mxu0
    %v1381 = vadd.f32 %v1367, %v1380
    %1382 = vdwg.mxu0
    %1383 = vmatpush.bf16.msra.mxu0 %v1069
    %1384 = vmatpush.bf16.msra.mxu0 %v1065
    %1385 = vmatpush.bf16.msra.mxu0 %v1061
    %1386 = vmatpush.bf16.msra.mxu0 %v1057
    %1387 = vmatpush.bf16.msra.mxu0 %v1053
    %1388 = vmatpush.bf16.msra.mxu0 %v1049
    %1389 = vmatpush.bf16.msra.mxu0 %v1045
    %1390 = vmatpush.bf16.msra.mxu0 %v1041
    %1391 = vmatmul.bf16.gmra.mxu0 %v147
    %v1392 = vpop.f32.mrf.mxu0
    %v1393 = vadd.f32 %v1379, %v1392
    %v1394 = vpop.f32.mrf.mxu0
    %v1395 = vadd.f32 %v1381, %v1394
    %1396 = vdwg.mxu0
    %1397 = vmatpush.bf16.msra.mxu0 %v1101
    %1398 = vmatpush.bf16.msra.mxu0 %v1097
    %1399 = vmatpush.bf16.msra.mxu0 %v1093
    %1400 = vmatpush.bf16.msra.mxu0 %v1089
    %1401 = vmatpush.bf16.msra.mxu0 %v1085
    %1402 = vmatpush.bf16.msra.mxu0 %v1081
    %1403 = vmatpush.bf16.msra.mxu0 %v1077
    %1404 = vmatpush.bf16.msra.mxu0 %v1073
    %1405 = vmatmul.bf16.gmra.mxu0 %v148
    %v1406 = vpop.f32.mrf.mxu0
    %v1407 = vadd.f32 %v1393, %v1406
    %v1408 = vpop.f32.mrf.mxu0
    %v1409 = vadd.f32 %v1395, %v1408
    %1410 = vdwg.mxu0
    %1411 = vmatpush.bf16.msra.mxu0 %v1133
    %1412 = vmatpush.bf16.msra.mxu0 %v1129
    %1413 = vmatpush.bf16.msra.mxu0 %v1125
    %1414 = vmatpush.bf16.msra.mxu0 %v1121
    %1415 = vmatpush.bf16.msra.mxu0 %v1117
    %1416 = vmatpush.bf16.msra.mxu0 %v1113
    %1417 = vmatpush.bf16.msra.mxu0 %v1109
    %1418 = vmatpush.bf16.msra.mxu0 %v1105
    %1419 = vmatmul.bf16.gmra.mxu0 %v149
    %v1420 = vpop.f32.mrf.mxu0
    %v1421 = vadd.f32 %v1407, %v1420
    %v1422 = vpop.f32.mrf.mxu0
    %v1423 = vadd.f32 %v1409, %v1422
    %1424 = vdwg.mxu0
    %1425 = vmatpush.bf16.msra.mxu0 0
    %1426 = vmatpush.bf16.msra.mxu0 0
    %1427 = vmatpush.bf16.msra.mxu0 0
    %1428 = vmatpush.bf16.msra.mxu0 0
    %1429 = vmatpush.bf16.msra.mxu0 0
    %1430 = vmatpush.bf16.msra.mxu0 0
    %1431 = vmatpush.bf16.msra.mxu0 0
    %1432 = vmatpush.bf16.msra.mxu0 %v1137
    %1433 = vmatmul.bf16.gmra.mxu0 %v1339
    %v1434 = vpop.f32.mrf.mxu0
    %v1435 = vadd.f32 %v1421, %v1434
    %v1436 = vpop.f32.mrf.mxu0
    %v1437 = vadd.f32 %v1423, %v1436
    %1438 = vdwg.mxu0
    %1439 = vmatpush.bf16.msra.mxu0 %v974
    %1440 = vmatpush.bf16.msra.mxu0 %v970
    %1441 = vmatpush.bf16.msra.mxu0 %v966
    %1442 = vmatpush.bf16.msra.mxu0 %v962
    %1443 = vmatpush.bf16.msra.mxu0 %v958
    %1444 = vmatpush.bf16.msra.mxu0 %v954
    %1445 = vmatpush.bf16.msra.mxu0 %v950
    %1446 = vmatpush.bf16.msra.mxu0 %v946
    %1447 = vmatmul.bf16.gmra.mxu0 %v144
    %v1448 = vpop.f32.mrf.mxu0
    %v1449 = vadd.f32 %v350, %v1448
    %v1450 = vpop.f32.mrf.mxu0
    %v1451 = vadd.f32 %v350, %v1450
    %1452 = vdwg.mxu0
    %1453 = vmatpush.bf16.msra.mxu0 %v1006
    %1454 = vmatpush.bf16.msra.mxu0 %v1002
    %1455 = vmatpush.bf16.msra.mxu0 %v998
    %1456 = vmatpush.bf16.msra.mxu0 %v994
    %1457 = vmatpush.bf16.msra.mxu0 %v990
    %1458 = vmatpush.bf16.msra.mxu0 %v986
    %1459 = vmatpush.bf16.msra.mxu0 %v982
    %1460 = vmatpush.bf16.msra.mxu0 %v978
    %1461 = vmatmul.bf16.gmra.mxu0 %v145
    %v1462 = vpop.f32.mrf.mxu0
    %v1463 = vadd.f32 %v1449, %v1462
    %v1464 = vpop.f32.mrf.mxu0
    %v1465 = vadd.f32 %v1451, %v1464
    %1466 = vdwg.mxu0
    %1467 = vmatpush.bf16.msra.mxu0 %v1038
    %1468 = vmatpush.bf16.msra.mxu0 %v1034
    %1469 = vmatpush.bf16.msra.mxu0 %v1030
    %1470 = vmatpush.bf16.msra.mxu0 %v1026
    %1471 = vmatpush.bf16.msra.mxu0 %v1022
    %1472 = vmatpush.bf16.msra.mxu0 %v1018
    %1473 = vmatpush.bf16.msra.mxu0 %v1014
    %1474 = vmatpush.bf16.msra.mxu0 %v1010
    %1475 = vmatmul.bf16.gmra.mxu0 %v146
    %v1476 = vpop.f32.mrf.mxu0
    %v1477 = vadd.f32 %v1463, %v1476
    %v1478 = vpop.f32.mrf.mxu0
    %v1479 = vadd.f32 %v1465, %v1478
    %1480 = vdwg.mxu0
    %1481 = vmatpush.bf16.msra.mxu0 %v1070
    %1482 = vmatpush.bf16.msra.mxu0 %v1066
    %1483 = vmatpush.bf16.msra.mxu0 %v1062
    %1484 = vmatpush.bf16.msra.mxu0 %v1058
    %1485 = vmatpush.bf16.msra.mxu0 %v1054
    %1486 = vmatpush.bf16.msra.mxu0 %v1050
    %1487 = vmatpush.bf16.msra.mxu0 %v1046
    %1488 = vmatpush.bf16.msra.mxu0 %v1042
    %1489 = vmatmul.bf16.gmra.mxu0 %v147
    %v1490 = vpop.f32.mrf.mxu0
    %v1491 = vadd.f32 %v1477, %v1490
    %v1492 = vpop.f32.mrf.mxu0
    %v1493 = vadd.f32 %v1479, %v1492
    %1494 = vdwg.mxu0
    %1495 = vmatpush.bf16.msra.mxu0 %v1102
    %1496 = vmatpush.bf16.msra.mxu0 %v1098
    %1497 = vmatpush.bf16.msra.mxu0 %v1094
    %1498 = vmatpush.bf16.msra.mxu0 %v1090
    %1499 = vmatpush.bf16.msra.mxu0 %v1086
    %1500 = vmatpush.bf16.msra.mxu0 %v1082
    %1501 = vmatpush.bf16.msra.mxu0 %v1078
    %1502 = vmatpush.bf16.msra.mxu0 %v1074
    %1503 = vmatmul.bf16.gmra.mxu0 %v148
    %v1504 = vpop.f32.mrf.mxu0
    %v1505 = vadd.f32 %v1491, %v1504
    %v1506 = vpop.f32.mrf.mxu0
    %v1507 = vadd.f32 %v1493, %v1506
    %1508 = vdwg.mxu0
    %1509 = vmatpush.bf16.msra.mxu0 %v1134
    %1510 = vmatpush.bf16.msra.mxu0 %v1130
    %1511 = vmatpush.bf16.msra.mxu0 %v1126
    %1512 = vmatpush.bf16.msra.mxu0 %v1122
    %1513 = vmatpush.bf16.msra.mxu0 %v1118
    %1514 = vmatpush.bf16.msra.mxu0 %v1114
    %1515 = vmatpush.bf16.msra.mxu0 %v1110
    %1516 = vmatpush.bf16.msra.mxu0 %v1106
    %1517 = vmatmul.bf16.gmra.mxu0 %v149
    %v1518 = vpop.f32.mrf.mxu0
    %v1519 = vadd.f32 %v1505, %v1518
    %v1520 = vpop.f32.mrf.mxu0
    %v1521 = vadd.f32 %v1507, %v1520
    %1522 = vdwg.mxu0
    %1523 = vmatpush.bf16.msra.mxu0 0
    %1524 = vmatpush.bf16.msra.mxu0 0
    %1525 = vmatpush.bf16.msra.mxu0 0
    %1526 = vmatpush.bf16.msra.mxu0 0
    %1527 = vmatpush.bf16.msra.mxu0 0
    %1528 = vmatpush.bf16.msra.mxu0 0
    %1529 = vmatpush.bf16.msra.mxu0 0
    %1530 = vmatpush.bf16.msra.mxu0 %v1138
    %1531 = vmatmul.bf16.gmra.mxu0 %v1339
    %v1532 = vpop.f32.mrf.mxu0
    %v1533 = vadd.f32 %v1519, %v1532
    %v1534 = vpop.f32.mrf.mxu0
    %v1535 = vadd.f32 %v1521, %v1534
    %1536 = vdwg.mxu0
    %1537 = vmatpush.bf16.msra.mxu0 %v975
    %1538 = vmatpush.bf16.msra.mxu0 %v971
    %1539 = vmatpush.bf16.msra.mxu0 %v967
    %1540 = vmatpush.bf16.msra.mxu0 %v963
    %1541 = vmatpush.bf16.msra.mxu0 %v959
    %1542 = vmatpush.bf16.msra.mxu0 %v955
    %1543 = vmatpush.bf16.msra.mxu0 %v951
    %1544 = vmatpush.bf16.msra.mxu0 %v947
    %1545 = vmatmul.bf16.gmra.mxu0 %v144
    %v1546 = vpop.f32.mrf.mxu0
    %v1547 = vadd.f32 %v351, %v1546
    %v1548 = vpop.f32.mrf.mxu0
    %v1549 = vadd.f32 %v351, %v1548
    %1550 = vdwg.mxu0
    %1551 = vmatpush.bf16.msra.mxu0 %v1007
    %1552 = vmatpush.bf16.msra.mxu0 %v1003
    %1553 = vmatpush.bf16.msra.mxu0 %v999
    %1554 = vmatpush.bf16.msra.mxu0 %v995
    %1555 = vmatpush.bf16.msra.mxu0 %v991
    %1556 = vmatpush.bf16.msra.mxu0 %v987
    %1557 = vmatpush.bf16.msra.mxu0 %v983
    %1558 = vmatpush.bf16.msra.mxu0 %v979
    %1559 = vmatmul.bf16.gmra.mxu0 %v145
    %v1560 = vpop.f32.mrf.mxu0
    %v1561 = vadd.f32 %v1547, %v1560
    %v1562 = vpop.f32.mrf.mxu0
    %v1563 = vadd.f32 %v1549, %v1562
    %1564 = vdwg.mxu0
    %1565 = vmatpush.bf16.msra.mxu0 %v1039
    %1566 = vmatpush.bf16.msra.mxu0 %v1035
    %1567 = vmatpush.bf16.msra.mxu0 %v1031
    %1568 = vmatpush.bf16.msra.mxu0 %v1027
    %1569 = vmatpush.bf16.msra.mxu0 %v1023
    %1570 = vmatpush.bf16.msra.mxu0 %v1019
    %1571 = vmatpush.bf16.msra.mxu0 %v1015
    %1572 = vmatpush.bf16.msra.mxu0 %v1011
    %1573 = vmatmul.bf16.gmra.mxu0 %v146
    %v1574 = vpop.f32.mrf.mxu0
    %v1575 = vadd.f32 %v1561, %v1574
    %v1576 = vpop.f32.mrf.mxu0
    %v1577 = vadd.f32 %v1563, %v1576
    %1578 = vdwg.mxu0
    %1579 = vmatpush.bf16.msra.mxu0 %v1071
    %1580 = vmatpush.bf16.msra.mxu0 %v1067
    %1581 = vmatpush.bf16.msra.mxu0 %v1063
    %1582 = vmatpush.bf16.msra.mxu0 %v1059
    %1583 = vmatpush.bf16.msra.mxu0 %v1055
    %1584 = vmatpush.bf16.msra.mxu0 %v1051
    %1585 = vmatpush.bf16.msra.mxu0 %v1047
    %1586 = vmatpush.bf16.msra.mxu0 %v1043
    %1587 = vmatmul.bf16.gmra.mxu0 %v147
    %v1588 = vpop.f32.mrf.mxu0
    %v1589 = vadd.f32 %v1575, %v1588
    %v1590 = vpop.f32.mrf.mxu0
    %v1591 = vadd.f32 %v1577, %v1590
    %1592 = vdwg.mxu0
    %1593 = vmatpush.bf16.msra.mxu0 %v1103
    %1594 = vmatpush.bf16.msra.mxu0 %v1099
    %1595 = vmatpush.bf16.msra.mxu0 %v1095
    %1596 = vmatpush.bf16.msra.mxu0 %v1091
    %1597 = vmatpush.bf16.msra.mxu0 %v1087
    %1598 = vmatpush.bf16.msra.mxu0 %v1083
    %1599 = vmatpush.bf16.msra.mxu0 %v1079
    %1600 = vmatpush.bf16.msra.mxu0 %v1075
    %1601 = vmatmul.bf16.gmra.mxu0 %v148
    %v1602 = vpop.f32.mrf.mxu0
    %v1603 = vadd.f32 %v1589, %v1602
    %v1604 = vpop.f32.mrf.mxu0
    %v1605 = vadd.f32 %v1591, %v1604
    %1606 = vdwg.mxu0
    %1607 = vmatpush.bf16.msra.mxu0 %v1135
    %1608 = vmatpush.bf16.msra.mxu0 %v1131
    %1609 = vmatpush.bf16.msra.mxu0 %v1127
    %1610 = vmatpush.bf16.msra.mxu0 %v1123
    %1611 = vmatpush.bf16.msra.mxu0 %v1119
    %1612 = vmatpush.bf16.msra.mxu0 %v1115
    %1613 = vmatpush.bf16.msra.mxu0 %v1111
    %1614 = vmatpush.bf16.msra.mxu0 %v1107
    %1615 = vmatmul.bf16.gmra.mxu0 %v149
    %v1616 = vpop.f32.mrf.mxu0
    %v1617 = vadd.f32 %v1603, %v1616
    %v1618 = vpop.f32.mrf.mxu0
    %v1619 = vadd.f32 %v1605, %v1618
    %1620 = vdwg.mxu0
    %1621 = vmatpush.bf16.msra.mxu0 0
    %1622 = vmatpush.bf16.msra.mxu0 0
    %1623 = vmatpush.bf16.msra.mxu0 0
    %1624 = vmatpush.bf16.msra.mxu0 0
    %1625 = vmatpush.bf16.msra.mxu0 0
    %1626 = vmatpush.bf16.msra.mxu0 0
    %1627 = vmatpush.bf16.msra.mxu0 0
    %1628 = vmatpush.bf16.msra.mxu0 %v1139
    %1629 = vmatmul.bf16.gmra.mxu0 %v1339
    %v1630 = vpop.f32.mrf.mxu0
    %v1631 = vadd.f32 %v1617, %v1630
    %v1632 = vpop.f32.mrf.mxu0
    %v1633 = vadd.f32 %v1619, %v1632
    %1634 = vdwg.mxu0
    %1635 = vmatpush.bf16.msra.mxu0 %v976
    %1636 = vmatpush.bf16.msra.mxu0 %v972
    %1637 = vmatpush.bf16.msra.mxu0 %v968
    %1638 = vmatpush.bf16.msra.mxu0 %v964
    %1639 = vmatpush.bf16.msra.mxu0 %v960
    %1640 = vmatpush.bf16.msra.mxu0 %v956
    %1641 = vmatpush.bf16.msra.mxu0 %v952
    %1642 = vmatpush.bf16.msra.mxu0 %v948
    %1643 = vmatmul.bf16.gmra.mxu0 %v144
    %v1644 = vpop.f32.mrf.mxu0
    %v1645 = vadd.f32 %v352, %v1644
    %v1646 = vpop.f32.mrf.mxu0
    %v1647 = vadd.f32 %v352, %v1646
    %1648 = vdwg.mxu0
    %1649 = vmatpush.bf16.msra.mxu0 %v1008
    %1650 = vmatpush.bf16.msra.mxu0 %v1004
    %1651 = vmatpush.bf16.msra.mxu0 %v1000
    %1652 = vmatpush.bf16.msra.mxu0 %v996
    %1653 = vmatpush.bf16.msra.mxu0 %v992
    %1654 = vmatpush.bf16.msra.mxu0 %v988
    %1655 = vmatpush.bf16.msra.mxu0 %v984
    %1656 = vmatpush.bf16.msra.mxu0 %v980
    %1657 = vmatmul.bf16.gmra.mxu0 %v145
    %v1658 = vpop.f32.mrf.mxu0
    %v1659 = vadd.f32 %v1645, %v1658
    %v1660 = vpop.f32.mrf.mxu0
    %v1661 = vadd.f32 %v1647, %v1660
    %1662 = vdwg.mxu0
    %1663 = vmatpush.bf16.msra.mxu0 %v1040
    %1664 = vmatpush.bf16.msra.mxu0 %v1036
    %1665 = vmatpush.bf16.msra.mxu0 %v1032
    %1666 = vmatpush.bf16.msra.mxu0 %v1028
    %1667 = vmatpush.bf16.msra.mxu0 %v1024
    %1668 = vmatpush.bf16.msra.mxu0 %v1020
    %1669 = vmatpush.bf16.msra.mxu0 %v1016
    %1670 = vmatpush.bf16.msra.mxu0 %v1012
    %1671 = vmatmul.bf16.gmra.mxu0 %v146
    %v1672 = vpop.f32.mrf.mxu0
    %v1673 = vadd.f32 %v1659, %v1672
    %v1674 = vpop.f32.mrf.mxu0
    %v1675 = vadd.f32 %v1661, %v1674
    %1676 = vdwg.mxu0
    %1677 = vmatpush.bf16.msra.mxu0 %v1072
    %1678 = vmatpush.bf16.msra.mxu0 %v1068
    %1679 = vmatpush.bf16.msra.mxu0 %v1064
    %1680 = vmatpush.bf16.msra.mxu0 %v1060
    %1681 = vmatpush.bf16.msra.mxu0 %v1056
    %1682 = vmatpush.bf16.msra.mxu0 %v1052
    %1683 = vmatpush.bf16.msra.mxu0 %v1048
    %1684 = vmatpush.bf16.msra.mxu0 %v1044
    %1685 = vmatmul.bf16.gmra.mxu0 %v147
    %v1686 = vpop.f32.mrf.mxu0
    %v1687 = vadd.f32 %v1673, %v1686
    %v1688 = vpop.f32.mrf.mxu0
    %v1689 = vadd.f32 %v1675, %v1688
    %1690 = vdwg.mxu0
    %1691 = vmatpush.bf16.msra.mxu0 %v1104
    %1692 = vmatpush.bf16.msra.mxu0 %v1100
    %1693 = vmatpush.bf16.msra.mxu0 %v1096
    %1694 = vmatpush.bf16.msra.mxu0 %v1092
    %1695 = vmatpush.bf16.msra.mxu0 %v1088
    %1696 = vmatpush.bf16.msra.mxu0 %v1084
    %1697 = vmatpush.bf16.msra.mxu0 %v1080
    %1698 = vmatpush.bf16.msra.mxu0 %v1076
    %1699 = vmatmul.bf16.gmra.mxu0 %v148
    %v1700 = vpop.f32.mrf.mxu0
    %v1701 = vadd.f32 %v1687, %v1700
    %v1702 = vpop.f32.mrf.mxu0
    %v1703 = vadd.f32 %v1689, %v1702
    %1704 = vdwg.mxu0
    %1705 = vmatpush.bf16.msra.mxu0 %v1136
    %1706 = vmatpush.bf16.msra.mxu0 %v1132
    %1707 = vmatpush.bf16.msra.mxu0 %v1128
    %1708 = vmatpush.bf16.msra.mxu0 %v1124
    %1709 = vmatpush.bf16.msra.mxu0 %v1120
    %1710 = vmatpush.bf16.msra.mxu0 %v1116
    %1711 = vmatpush.bf16.msra.mxu0 %v1112
    %1712 = vmatpush.bf16.msra.mxu0 %v1108
    %1713 = vmatmul.bf16.gmra.mxu0 %v149
    %v1714 = vpop.f32.mrf.mxu0
    %v1715 = vadd.f32 %v1701, %v1714
    %v1716 = vpop.f32.mrf.mxu0
    %v1717 = vadd.f32 %v1703, %v1716
    %1718 = vdwg.mxu0
    %1719 = vmatpush.bf16.msra.mxu0 0
    %1720 = vmatpush.bf16.msra.mxu0 0
    %1721 = vmatpush.bf16.msra.mxu0 0
    %1722 = vmatpush.bf16.msra.mxu0 0
    %1723 = vmatpush.bf16.msra.mxu0 0
    %1724 = vmatpush.bf16.msra.mxu0 0
    %1725 = vmatpush.bf16.msra.mxu0 0
    %1726 = vmatpush.bf16.msra.mxu0 %v1140
    %1727 = vmatmul.bf16.gmra.mxu0 %v1339
    %v1728 = vpop.f32.mrf.mxu0
    %v1729 = vadd.f32 %v1715, %v1728
    %v1730 = vpop.f32.mrf.mxu0
    %v1731 = vadd.f32 %v1717, %v1730
    %1732 = vdwg.mxu0
    %v1733 = vmax.f32 %v1435, 0.0
    %v1734 = vmax.f32 %v1533, 0.0
    %v1735 = vmax.f32 %v1631, 0.0
    %v1736 = vmax.f32 %v1729, 0.0
    %v1737 = vmax.f32 %v1437, 0.0
    %v1738 = vmax.f32 %v1535, 0.0
    %v1739 = vmax.f32 %v1633, 0.0
    %v1740 = vmax.f32 %v1731, 0.0
    %v1741 = vpack.c.bf16 %v1734, %v1733
    %v1742 = vpack.c.bf16 %v1736, %v1735
    %v1743 = vpack.c.bf16 %v1738, %v1737
    %v1744 = vpack.c.bf16 %v1740, %v1739
    %v1749 = vrot.slane %v1741, 3
    %v1750 = vrot.slane %v1742, 6
    %v1751 = vrot.slane %v1742, 1
    %v1752 = vrot.slane %v1743, 3
    %v1753 = vrot.slane %v1744, 6
    %v1754 = vrot.slane %v1744, 1
    %vm1755 = vcmask 1040384
    %v1758 = vsel %vm1755, %v1741, %v1749
    %vm1759 = vcmask 1042434
    %v1762 = vsel %vm1759, %v1750, %v1751
    %vm1763 = vcmask 1041408
    %v1764 = vsel %vm1763, %v1758, %v1762
    %vm1765 = vcmask 1041409
    %v1766 = vsel %vm1765, %v1741, %v1749
    %vm1767 = vcmask 1043459
    %v1768 = vsel %vm1767, %v1750, %v1751
    %vm1769 = vcmask 1042433
    %v1770 = vsel %vm1769, %v1766, %v1768
    %v1772 = vrot.slane %v1770, 1
    %v1773 = vsel %vm1759, %v1741, %v1749
    %vm1774 = vcmask 1044484
    %v1775 = vsel %vm1774, %v1750, %v1751
    %vm1776 = vcmask 1043458
    %v1777 = vsel %vm1776, %v1773, %v1775
    %v1779 = vrot.slane %v1777, 2
    %v1780 = vsel %vm1767, %v1741, %v1749
    %vm1781 = vcmask 1045509
    %v1782 = vsel %vm1781, %v1750, %v1751
    %vm1783 = vcmask 1044483
    %v1784 = vsel %vm1783, %v1780, %v1782
    %v1786 = vrot.slane %v1784, 3
    %v1789 = vsel %vm1755, %v1743, %v1752
    %v1792 = vsel %vm1759, %v1753, %v1754
    %v1793 = vsel %vm1763, %v1789, %v1792
    %v1794 = vsel %vm1765, %v1743, %v1752
    %v1795 = vsel %vm1767, %v1753, %v1754
    %v1796 = vsel %vm1769, %v1794, %v1795
    %v1798 = vrot.slane %v1796, 1
    %v1799 = vsel %vm1759, %v1743, %v1752
    %v1800 = vsel %vm1774, %v1753, %v1754
    %v1801 = vsel %vm1776, %v1799, %v1800
    %v1803 = vrot.slane %v1801, 2
    %v1804 = vsel %vm1767, %v1743, %v1752
    %v1805 = vsel %vm1781, %v1753, %v1754
    %v1806 = vsel %vm1783, %v1804, %v1805
    %v1808 = vrot.slane %v1806, 3
    %1817 = vst [vmem:[#allocation8] sm:$0xf] %v1764
    %1818 = vst [vmem:[#allocation8 + $0x4] sm:$0xf] %v1772
    %1819 = vst [vmem:[#allocation8 + $0x8] sm:$0xf] %v1779
    %1820 = vst [vmem:[#allocation8 + $0xc] sm:$0xf] %v1786
    %1821 = vst [vmem:[#allocation8 + $0x10] sm:$0xf] %v1793
    %1822 = vst [vmem:[#allocation8 + $0x14] sm:$0xf] %v1798
    %1823 = vst [vmem:[#allocation8 + $0x18] sm:$0xf] %v1803
    %1824 = vst [vmem:[#allocation8 + $0x1c] sm:$0xf] %v1808
    // Predicated region
    $region26: #{tpu_custom_call.1} parent=1 // pred_check
      _
    $region27: #{tpu_custom_call.1} parent=1 // pred_check_branch
      %1826 = sbr.rel (0) target = $region29
    $region28: #{tpu_custom_call.1} parent=1 // pred_region
      %1828 = vsyncadd [#allocation4], 448
      %s1829 = sshll.u32 [#allocation8], 4
      %s1830 = int_to_ptr.vmem [resolvable:$true] %s1829
      %s1831 = sshll.u32 %s3, 4
      %s1832 = int_to_ptr.hbm [resolvable:$true] %s1831
      %1837 = dma.vmem_to_hbm [thread:$0]  %s1830, 64, %s1832, [#allocation4], 64, 64, 4
    $region29: #{tpu_custom_call.1} parent=1 // pred_fallthru
      _
    // Predicated region
    $region30: #{tpu_custom_call.1} parent=1 // pred_check
      _
    $region31: #{tpu_custom_call.1} parent=1 // pred_check_branch
      %1839 = sbr.rel (0) target = $region33
    $region32: #{tpu_custom_call.1} parent=1 // pred_region
      %1841 = dma.done [#allocation4], 512
    $region33: #{tpu_custom_call.1} parent=1 // pred_fallthru
      _
    %1842 = vsyncpa [#allocation3], 1
    %1843 = vsyncpa [#allocation6], 1
    %1844 = vsyncpa [#allocation4], 1

</llo_original>
